<compile_context>
chip_gen: v7x
topology: tpu7x:2x2x1
jax: 0.10.0
libtpu: 0.0.40
codegen_flags: <defaults>
</compile_context>

<pallas_src>
import functools
import math

import jax
import jax.numpy as jnp
from jax import lax
from jax.experimental import pallas as pl
from jax.experimental.pallas import tpu as pltpu


def _round_up(n, m):
    return ((n + m - 1) // m) * m


def _gelu(h, use_tanh):
    if use_tanh:
        # tanh-approx GELU lowers to the EUP slot (idle under MXU work).
        c = math.sqrt(2.0 / math.pi)
        return 0.5 * h * (1.0 + jnp.tanh(c * (h + 0.044715 * (h * h * h))))
    # exact erf GELU -- matches nn.GELU() default.
    return 0.5 * h * (1.0 + lax.erf(h * (1.0 / math.sqrt(2.0))))


def _mlp_kernel_resident(x_ref, w1_ref, w2_ref, b2_ref, o_ref, *, use_tanh_gelu):
    """Weights resident in VMEM; grid tiles the batch only."""
    cdt = w1_ref.dtype
    x = x_ref[...].astype(cdt)
    h = jnp.dot(x, w1_ref[...], preferred_element_type=jnp.float32)   # (tm, Hp) f32
    g = _gelu(h, use_tanh_gelu)                                       # f32 elementwise
    y = jnp.dot(g.astype(cdt), w2_ref[...], preferred_element_type=jnp.float32)
    o_ref[...] = (y + b2_ref[...]).astype(o_ref.dtype)


def _mlp_kernel_streamed(x_ref, w1_ref, w2_ref, b2_ref, o_ref, acc_ref, *, use_tanh_gelu):
    """Hidden dim streamed in slices; partial results accumulated in f32 scratch."""
    j = pl.program_id(1)

    @pl.when(j == 0)
    def _():
        acc_ref[...] = jnp.zeros_like(acc_ref)

    cdt = w1_ref.dtype
    x = x_ref[...].astype(cdt)
    h = jnp.dot(x, w1_ref[...], preferred_element_type=jnp.float32)   # (tm, tn) f32
    g = _gelu(h, use_tanh_gelu)
    acc_ref[...] += jnp.dot(g.astype(cdt), w2_ref[...],
                            preferred_element_type=jnp.float32)

    @pl.when(j == pl.num_programs(1) - 1)
    def _():
        o_ref[...] = (acc_ref[...] + b2_ref[...]).astype(o_ref.dtype)


def prepare_mlp_params(w1, w2, b2, *, compute_dtype=jnp.bfloat16):
    """One-time (init-side) weight prep: K-major transpose, lane-dense zero-pad,
    bf16 cast. Keeps per-forward HBM traffic to a single weight read."""
    H, F = w1.shape                      # fc1.weight: (2F, F) PyTorch layout
    assert w2.shape == (F, H) and b2.shape == (F,)
    Fp, Hp = _round_up(F, 128), _round_up(H, 128)
    w1t = jnp.pad(w1.T, ((0, Fp - F), (0, Hp - H))).astype(compute_dtype)   # (Fp, Hp)
    w2t = jnp.pad(w2.T, ((0, Hp - H), (0, Fp - F))).astype(compute_dtype)   # (Hp, Fp)
    b2p = jnp.pad(b2, (0, Fp - F)).reshape(1, Fp).astype(jnp.float32)
    return dict(w1t=w1t, w2t=w2t, b2=b2p, n_features=F, n_hidden=H)


def _vmem_plan():
    """Generation-aware VMEM budget / scoped-limit cap."""
    cap = 64 << 20                       # conservative fallback (v7x per-TC size)
    try:
        cap = int(getattr(pltpu.get_tpu_info(), "vmem_capacity_bytes"))
    except Exception:
        pass
    if cap <= (96 << 20):                # v7x-class: 64 MiB per TensorCore
        budget = 44 << 20
        limit_cap = min(max(cap - (8 << 20), 32 << 20), 56 << 20)
    else:                                # v5e / v6e: 128 MiB
        budget = 100 << 20
        limit_cap = 112 << 20
    return budget, limit_cap


def mlp_forward(x, params, *, use_tanh_gelu=False, force_stream=False, stream_tn=None):
    """x: (B, F) f32.  params: output of prepare_mlp_params."""
    w1t, w2t, b2 = params["w1t"], params["w2t"], params["b2"]
    F = params["n_features"]
    Fp, Hp = w1t.shape
    B = x.shape[0]
    assert x.shape[1] == F

    out_dt = x.dtype
    csize = jnp.dtype(w1t.dtype).itemsize
    xsize = jnp.dtype(x.dtype).itemsize
    osize = jnp.dtype(out_dt).itemsize

    budget, limit_cap = _vmem_plan()
    B8 = max(_round_up(B, 8), 8)
    kern_kw = dict(use_tanh_gelu=use_tanh_gelu)

    # ---- resident-weight plan (sized for double-buffered weights; constant
    #      index_map means Pallas does not re-DMA them across grid steps) ----
    weights_bytes = 2 * (Fp * Hp + Hp * Fp) * csize + 2 * Fp * 4
    per_row = 2 * Fp * (xsize + osize) + 2 * Hp * 4 + Fp * 4
    tm_res = None
    if not force_stream:
        for cand in (1024, 512, 256, 128, 64, 32, 16, 8):
            if cand > B8:
                continue
            if weights_bytes + cand * per_row <= budget:
                tm_res = cand
                break

    if tm_res is not None:
        tm = tm_res
        Bp = _round_up(B, tm)
        x_p = x if (Bp == B and Fp == F) else jnp.pad(x, ((0, Bp - B), (0, Fp - F)))
        est = weights_bytes + tm * per_row
        vmem_limit = int(min(limit_cap, max(32 << 20, est + (8 << 20))))
        out_p = pl.pallas_call(
            functools.partial(_mlp_kernel_resident, **kern_kw),
            out_shape=jax.ShapeDtypeStruct((Bp, Fp), out_dt),
            grid=(Bp // tm,),
            in_specs=[
                pl.BlockSpec((tm, Fp), lambda i: (i, 0)),     # x tile (pipelined)
                pl.BlockSpec((Fp, Hp), lambda i: (0, 0)),     # w1t resident, K-major
                pl.BlockSpec((Hp, Fp), lambda i: (0, 0)),     # w2t resident, K-major
                pl.BlockSpec((1, Fp), lambda i: (0, 0)),      # bias resident
            ],
            out_specs=pl.BlockSpec((tm, Fp), lambda i: (i, 0)),
            compiler_params=pltpu.CompilerParams(
                dimension_semantics=("parallel",),
                vmem_limit_bytes=vmem_limit,
            ),
        )(x_p, w1t, w2t, b2)
    else:
        # ---- hidden-dim-streamed fallback: weights too big for residency ----
        tm = 8
        for cand in (256, 128, 64, 32, 16, 8):
            if cand <= B8:
                tm = cand
                break

        def stream_bytes(tm_, tn_):
            return (2 * tm_ * Fp * (xsize + osize)          # x / out tiles (dbl-buf)
                    + tm_ * Fp * 4                          # f32 accumulator scratch
                    + 2 * (Fp * tn_ + tn_ * Fp) * csize     # w1t / w2t slices (dbl-buf)
                    + 2 * Fp * 4                            # bias
                    + 2 * tm_ * tn_ * 4)                    # f32 intermediates

        while tm > 8 and stream_bytes(tm, 128) > budget:
            tm //= 2
        tn = 128
        for cand in (4096, 2048, 1024, 512, 256, 128):
            if Hp % cand == 0 and stream_bytes(tm, cand) <= budget:
                tn = cand
                break
        if stream_tn is not None and Hp % stream_tn == 0:
            tn = stream_tn

        Bp = _round_up(B, tm)
        x_p = x if (Bp == B and Fp == F) else jnp.pad(x, ((0, Bp - B), (0, Fp - F)))
        est = stream_bytes(tm, tn)
        vmem_limit = int(min(limit_cap, max(32 << 20, est + (8 << 20))))
        out_p = pl.pallas_call(
            functools.partial(_mlp_kernel_streamed, **kern_kw),
            out_shape=jax.ShapeDtypeStruct((Bp, Fp), out_dt),
            grid=(Bp // tm, Hp // tn),
            in_specs=[
                pl.BlockSpec((tm, Fp), lambda i, j: (i, 0)),   # x tile
                pl.BlockSpec((Fp, tn), lambda i, j: (0, j)),   # w1t hidden slice
                pl.BlockSpec((tn, Fp), lambda i, j: (j, 0)),   # w2t hidden slice
                pl.BlockSpec((1, Fp), lambda i, j: (0, 0)),    # bias
            ],
            out_specs=pl.BlockSpec((tm, Fp), lambda i, j: (i, 0)),
            scratch_shapes=[pltpu.VMEM((tm, Fp), jnp.float32)],
            compiler_params=pltpu.CompilerParams(
                dimension_semantics=("parallel", "arbitrary"),
                vmem_limit_bytes=vmem_limit,
            ),
        )(x_p, w1t, w2t, b2)

    if Bp == B and Fp == F:
        return out_p
    return out_p[:B, :F]


if __name__ == "__main__":
    n_features = 32
    batch = 8

    key = jax.random.PRNGKey(0)
    k_x, k_w1, k_w2, k_b2 = jax.random.split(key, 4)

    # Mirrors the module: fc1.weight ~ U(0,1) (2F, F) no bias;
    # fc2.weight ~ U(0,1) (F, 2F); fc2.bias ~ U(-1/sqrt(2F), 1/sqrt(2F)).
    x = jax.random.normal(k_x, (batch, n_features), dtype=jnp.float32)
    w1 = jax.random.uniform(k_w1, (2 * n_features, n_features), dtype=jnp.float32,
                            minval=0.0, maxval=1.0)
    w2 = jax.random.uniform(k_w2, (n_features, 2 * n_features), dtype=jnp.float32,
                            minval=0.0, maxval=1.0)
    bound = 1.0 / math.sqrt(2 * n_features)
    b2 = jax.random.uniform(k_b2, (n_features,), dtype=jnp.float32,
                            minval=-bound, maxval=bound)

    def ref_mlp(xx, ww1, ww2, bb2):
        h = xx @ ww1.T
        g = 0.5 * h * (1.0 + lax.erf(h / math.sqrt(2.0)))
        return g @ ww2.T + bb2

    # Resident-weight path.
    params = prepare_mlp_params(w1, w2, b2)            # one-time init-side prep
    out = jax.block_until_ready(mlp_forward(x, params))
    y_ref = ref_mlp(x, w1, w2, b2)
    assert out.shape == (batch, n_features)
    assert bool(jnp.allclose(out, y_ref, rtol=5e-2, atol=5e-1)), \
        float(jnp.max(jnp.abs(out - y_ref)))

    # Also exercise the hidden-dim-streamed fallback (multi-step accumulation).
    F2, B2 = 256, 16
    k2 = jax.random.split(jax.random.PRNGKey(1), 4)
    x2 = jax.random.normal(k2[0], (B2, F2), dtype=jnp.float32)
    w1b = jax.random.uniform(k2[1], (2 * F2, F2), dtype=jnp.float32)
    w2b = jax.random.uniform(k2[2], (F2, 2 * F2), dtype=jnp.float32)
    b2b = jax.random.uniform(k2[3], (F2,), dtype=jnp.float32,
                             minval=-1.0 / math.sqrt(2 * F2),
                             maxval=1.0 / math.sqrt(2 * F2))
    params2 = prepare_mlp_params(w1b, w2b, b2b)
    out2 = jax.block_until_ready(
        mlp_forward(x2, params2, force_stream=True, stream_tn=128))
    y2 = ref_mlp(x2, w1b, w2b, b2b)
    assert bool(jnp.allclose(out2, y2, rtol=5e-2, atol=5e-1)), \
        float(jnp.max(jnp.abs(out2 - y2)))

    print("KERNEL_OK")
</pallas_src>

<mosaic_0001>
module attributes {stable_mosaic.version = 11 : i64} {
  func.func @_mlp_kernel_resident(%arg0: i32, %arg1: memref<8x128xf32, #tpu.memory_space<vmem>>, %arg2: memref<128x128xbf16, #tpu.memory_space<vmem>>, %arg3: memref<128x128xbf16, #tpu.memory_space<vmem>>, %arg4: memref<1x128xf32, #tpu.memory_space<vmem>>, %arg5: memref<8x128xf32, #tpu.memory_space<vmem>>) attributes {dimension_semantics = [#tpu.dimension_semantics<parallel>], iteration_bounds = array<i64: 1>, scalar_prefetch = 0 : i64, scratch_operands = 0 : i64, tpu.core_type = #tpu.core_type<tc>, window_params = [{transform_indices = @transform_0, window_bounds = array<i64: 8, 128>}, {pipeline_mode = #tpu.pipeline_mode<synchronous>, transform_indices = @transform_1, window_bounds = array<i64: 128, 128>}, {pipeline_mode = #tpu.pipeline_mode<synchronous>, transform_indices = @transform_2, window_bounds = array<i64: 128, 128>}, {pipeline_mode = #tpu.pipeline_mode<synchronous>, transform_indices = @transform_3, window_bounds = array<i64: 1, 128>}, {transform_indices = @transform_4, window_bounds = array<i64: 8, 128>}]} {
    %c0 = arith.constant 0 : index
    %c0_0 = arith.constant 0 : index
    %0 = vector.load %arg1[%c0, %c0_0] : memref<8x128xf32, #tpu.memory_space<vmem>>, vector<8x128xf32>
    %1 = arith.truncf %0 : vector<8x128xf32> to vector<8x128xbf16>
    %c0_1 = arith.constant 0 : index
    %c0_2 = arith.constant 0 : index
    %2 = vector.load %arg2[%c0_1, %c0_2] : memref<128x128xbf16, #tpu.memory_space<vmem>>, vector<128x128xbf16>
    %cst = arith.constant dense<0.000000e+00> : vector<8x128xf32>
    %3 = tpu.matmul %1, %2, %cst {dimension_numbers = #tpu.dot_dimension_numbers<[1], [0], [0], [1], [0, 0, 1, 1], [], []>} : vector<8x128xbf16>, vector<128x128xbf16>, vector<8x128xf32> -> vector<8x128xf32>
    %cst_3 = arith.constant 5.000000e-01 : f32
    %4 = vector.broadcast %cst_3 : f32 to vector<8x128xf32>
    %5 = arith.mulf %4, %3 : vector<8x128xf32>
    %cst_4 = arith.constant 0.707106769 : f32
    %6 = vector.broadcast %cst_4 : f32 to vector<8x128xf32>
    %7 = arith.mulf %3, %6 : vector<8x128xf32>
    %8 = math.erf %7 : vector<8x128xf32>
    %cst_5 = arith.constant 1.000000e+00 : f32
    %9 = vector.broadcast %cst_5 : f32 to vector<8x128xf32>
    %10 = arith.addf %9, %8 : vector<8x128xf32>
    %11 = arith.mulf %5, %10 : vector<8x128xf32>
    %12 = arith.truncf %11 : vector<8x128xf32> to vector<8x128xbf16>
    %c0_6 = arith.constant 0 : index
    %c0_7 = arith.constant 0 : index
    %13 = vector.load %arg3[%c0_6, %c0_7] : memref<128x128xbf16, #tpu.memory_space<vmem>>, vector<128x128xbf16>
    %cst_8 = arith.constant dense<0.000000e+00> : vector<8x128xf32>
    %14 = tpu.matmul %12, %13, %cst_8 {dimension_numbers = #tpu.dot_dimension_numbers<[1], [0], [0], [1], [0, 0, 1, 1], [], []>} : vector<8x128xbf16>, vector<128x128xbf16>, vector<8x128xf32> -> vector<8x128xf32>
    %c0_9 = arith.constant 0 : index
    %c0_10 = arith.constant 0 : index
    %15 = vector.load %arg4[%c0_9, %c0_10] : memref<1x128xf32, #tpu.memory_space<vmem>>, vector<1x128xf32>
    %16 = vector.broadcast %15 : vector<1x128xf32> to vector<8x128xf32>
    %17 = arith.addf %14, %16 : vector<8x128xf32>
    %c0_11 = arith.constant 0 : index
    %c0_12 = arith.constant 0 : index
    %18 = vector.load %arg5[%c0_11, %c0_12] : memref<8x128xf32, #tpu.memory_space<vmem>>, vector<8x128xf32>
    tpu.vector_store %arg5[%c0_11, %c0_12], %17 {strides = array<i32>} : memref<8x128xf32, #tpu.memory_space<vmem>>, vector<8x128xf32>,
    return
  }
  func.func @transform_0(%arg0: i32) -> (i32, i32) {
    %c0_i32 = arith.constant 0 : i32
    %c0_i32_0 = arith.constant 0 : i32
    return %arg0, %c0_i32 : i32, i32
  }
  func.func @transform_1(%arg0: i32) -> (i32, i32) {
    %c0_i32 = arith.constant 0 : i32
    %c0_i32_0 = arith.constant 0 : i32
    %c0_i32_1 = arith.constant 0 : i32
    return %c0_i32, %c0_i32_0 : i32, i32
  }
  func.func @transform_2(%arg0: i32) -> (i32, i32) {
    %c0_i32 = arith.constant 0 : i32
    %c0_i32_0 = arith.constant 0 : i32
    %c0_i32_1 = arith.constant 0 : i32
    return %c0_i32, %c0_i32_0 : i32, i32
  }
  func.func @transform_3(%arg0: i32) -> (i32, i32) {
    %c0_i32 = arith.constant 0 : i32
    %c0_i32_0 = arith.constant 0 : i32
    %c0_i32_1 = arith.constant 0 : i32
    return %c0_i32, %c0_i32_0 : i32, i32
  }
  func.func @transform_4(%arg0: i32) -> (i32, i32) {
    %c0_i32 = arith.constant 0 : i32
    %c0_i32_0 = arith.constant 0 : i32
    return %arg0, %c0_i32 : i32, i32
  }
}

</mosaic_0001>

<llo_original>
// kernel: tpu_custom_call.1
$region0: #{tpu_custom_call.1}
  #allocation0 [shape = 'u32[]', space=smem, size = 0x4, offset = 0x4, fixed_abs, tag = 'smem constant byte address 0x4 - core index']
  #allocation1 [shape = 'u32[144,128]{1,0:T(1,128)}', space=vmem, size = 0x12000, scoped, tag = 'internal scratch']
  %s0 = inlined_call_operand.hbm [shape: f32[8,128], index: 0, kind: input, shape index: {}]
  %s1 = inlined_call_operand.hbm [shape: bf16[128,128], index: 1, kind: input, shape index: {}]
  %s2 = inlined_call_operand.hbm [shape: bf16[128,128], index: 2, kind: input, shape index: {}]
  %s3 = inlined_call_operand.vmem [shape: f32[1,128], index: 3, kind: input, shape index: {}]
  %s4 = inlined_call_operand.hbm [shape: f32[8,128], index: 4, kind: output, shape index: {}]
  %s5 = sld [smem:[#allocation0]]
  $region38: #{tpu_custom_call.1} parent=0
    _
  %s7 = ssub.s32 1, %s5
  %s8 = scalar_select 0, %s7, %s5
  $region1: #{tpu_custom_call.1} parent=0
    #allocation2 [shape = 'u8[4096]{0}', space=vmem, size = 0x1000, scoped, tag = 'input window, operand 0, single buffered']
    #allocation3 [shape = 's32[1]{0}', space=sflag, size = 0x4, scoped, tag = 'scoped memory for tpu_custom_call.1']
    #allocation4 [shape = 's32[1]{0}', space=sflag, size = 0x4, scoped, tag = 'scoped memory for tpu_custom_call.1']
    #allocation5 [shape = 'u8[32768]{0}', space=vmem, size = 0x8000, scoped, tag = 'input window, operand 1, single buffered']
    #allocation6 [shape = 's32[1]{0}', space=sflag, size = 0x4, scoped, tag = 'scoped memory for tpu_custom_call.1']
    #allocation7 [shape = 'u8[32768]{0}', space=vmem, size = 0x8000, scoped, tag = 'input window, operand 2, single buffered']
    #allocation8 [shape = 'u8[4096]{0}', space=vmem, size = 0x1000, scoped, tag = 'output window, operand 0, single buffered']
    %9 = vsyncpa [#allocation3], 0
    %10 = vsyncpa [#allocation6], 0
    %11 = vsyncpa [#allocation4], 0
    // Predicated region
    $region2: #{tpu_custom_call.1} parent=1 // pred_check
      _
    $region3: #{tpu_custom_call.1} parent=1 // pred_check_branch
      %13 = sbr.rel (0) target = $region5
    $region4: #{tpu_custom_call.1} parent=1 // pred_region
      %s15 = ssub.s32 128, 128
      %16 = vsyncadd [#allocation3], %s15
      %s18 = sshll.u32 [#allocation2], 4
      %s19 = int_to_ptr.vmem [resolvable:$true] %s18
      %21 = dma.hbm_to_vmem [thread:$0]  %s0, 128, %s19, [#allocation3]
    $region5: #{tpu_custom_call.1} parent=1 // pred_fallthru
      _
    // Predicated region
    $region6: #{tpu_custom_call.1} parent=1 // pred_check
      _
    $region7: #{tpu_custom_call.1} parent=1 // pred_check_branch
      %23 = sbr.rel (0) target = $region9
    $region8: #{tpu_custom_call.1} parent=1 // pred_region
      %s25 = ssub.s32 1024, 1024
      %26 = vsyncadd [#allocation6], %s25
      %s27 = sshll.u32 [#allocation5], 4
      %s28 = int_to_ptr.vmem [resolvable:$true] %s27
      %33 = dma.hbm_to_vmem [thread:$0]  %s1, 1024, %s28, [#allocation6], 64, 64, 4
    $region9: #{tpu_custom_call.1} parent=1 // pred_fallthru
      _
    // Predicated region
    $region10: #{tpu_custom_call.1} parent=1 // pred_check
      _
    $region11: #{tpu_custom_call.1} parent=1 // pred_check_branch
      %35 = sbr.rel (0) target = $region13
    $region12: #{tpu_custom_call.1} parent=1 // pred_region
      %s37 = ssub.s32 1024, 1024
      %38 = vsyncadd [#allocation6], %s37
      %s39 = sshll.u32 [#allocation7], 4
      %s40 = int_to_ptr.vmem [resolvable:$true] %s39
      %45 = dma.hbm_to_vmem [thread:$0]  %s2, 1024, %s40, [#allocation6], 64, 64, 4
    $region13: #{tpu_custom_call.1} parent=1 // pred_fallthru
      _
    // Predicated region
    $region14: #{tpu_custom_call.1} parent=1 // pred_check
      _
    $region15: #{tpu_custom_call.1} parent=1 // pred_check_branch
      %47 = sbr.rel (0) target = $region17
    $region16: #{tpu_custom_call.1} parent=1 // pred_region
      _
    $region17: #{tpu_custom_call.1} parent=1 // pred_fallthru
      _
    // Predicated region
    $region18: #{tpu_custom_call.1} parent=1 // pred_check
      _
    $region19: #{tpu_custom_call.1} parent=1 // pred_check_branch
      %49 = sbr.rel (0) target = $region21
    $region20: #{tpu_custom_call.1} parent=1 // pred_region
      %50 = dma.done [#allocation3], 128
    $region21: #{tpu_custom_call.1} parent=1 // pred_fallthru
      _
    // Predicated region
    $region22: #{tpu_custom_call.1} parent=1 // pred_check
      _
    $region23: #{tpu_custom_call.1} parent=1 // pred_check_branch
      %52 = sbr.rel (0) target = $region25
    $region24: #{tpu_custom_call.1} parent=1 // pred_region
      %53 = dma.done [#allocation6], 1024
    $region25: #{tpu_custom_call.1} parent=1 // pred_fallthru
      _
    // Predicated region
    $region26: #{tpu_custom_call.1} parent=1 // pred_check
      _
    $region27: #{tpu_custom_call.1} parent=1 // pred_check_branch
      %55 = sbr.rel (0) target = $region29
    $region28: #{tpu_custom_call.1} parent=1 // pred_region
      %56 = dma.done [#allocation6], 1024
    $region29: #{tpu_custom_call.1} parent=1 // pred_fallthru
      _
    %v58 = vld [vmem:[#allocation2] sm:$0xff]
    %v59 = vpack.c.bf16 %v58, %v58
    %v60 = vld [vmem:[#allocation5] sm:$0xf]
    %v61 = vld [vmem:[#allocation5 + $0x4] sm:$0xf]
    %v62 = vld [vmem:[#allocation5 + $0x8] sm:$0xf]
    %v63 = vld [vmem:[#allocation5 + $0xc] sm:$0xf]
    %v64 = vld [vmem:[#allocation5 + $0x10] sm:$0xf]
    %v65 = vld [vmem:[#allocation5 + $0x14] sm:$0xf]
    %v66 = vld [vmem:[#allocation5 + $0x18] sm:$0xf]
    %v67 = vld [vmem:[#allocation5 + $0x1c] sm:$0xf]
    %v68 = vld [vmem:[#allocation5 + $0x20] sm:$0xf]
    %v69 = vld [vmem:[#allocation5 + $0x24] sm:$0xf]
    %v70 = vld [vmem:[#allocation5 + $0x28] sm:$0xf]
    %v71 = vld [vmem:[#allocation5 + $0x2c] sm:$0xf]
    %v72 = vld [vmem:[#allocation5 + $0x30] sm:$0xf]
    %v73 = vld [vmem:[#allocation5 + $0x34] sm:$0xf]
    %v74 = vld [vmem:[#allocation5 + $0x38] sm:$0xf]
    %v75 = vld [vmem:[#allocation5 + $0x3c] sm:$0xf]
    %v92 = vunpack.c.l.b16 %v60
    %v93 = vunpack.c.l.b16 %v61
    %v94 = vunpack.c.l.b16 %v62
    %v95 = vunpack.c.l.b16 %v63
    %v96 = vunpack.c.l.b16 %v64
    %v97 = vunpack.c.l.b16 %v65
    %v98 = vunpack.c.l.b16 %v66
    %v99 = vunpack.c.l.b16 %v67
    %v100 = vunpack.c.l.b16 %v68
    %v101 = vunpack.c.l.b16 %v69
    %v102 = vunpack.c.l.b16 %v70
    %v103 = vunpack.c.l.b16 %v71
    %v104 = vunpack.c.l.b16 %v72
    %v105 = vunpack.c.l.b16 %v73
    %v106 = vunpack.c.l.b16 %v74
    %v107 = vunpack.c.l.b16 %v75
    %v108 = vpack.c.b16 %v93, %v92
    %v109 = vpack.c.b16 %v95, %v94
    %v110 = vpack.c.b16 %v97, %v96
    %v111 = vpack.c.b16 %v99, %v98
    %v112 = vpack.c.b16 %v101, %v100
    %v113 = vpack.c.b16 %v103, %v102
    %v114 = vpack.c.b16 %v105, %v104
    %v115 = vpack.c.b16 %v107, %v106
    %124 = vmatprep.subr.bf16.mxu0 0
    %125 = vmatpush1.bf16.msra.mxu0 %v108
    %126 = vmatprep.subr.bf16.mxu0 0
    %127 = vmatpush1.bf16.msra.mxu0 %v109
    %128 = vmatprep.subr.bf16.mxu0 0
    %129 = vmatpush1.bf16.msra.mxu0 %v110
    %130 = vmatprep.subr.bf16.mxu0 0
    %131 = vmatpush1.bf16.msra.mxu0 %v111
    %132 = vmatprep.subr.bf16.mxu0 0
    %133 = vmatpush1.bf16.msra.mxu0 %v112
    %134 = vmatprep.subr.bf16.mxu0 0
    %135 = vmatpush1.bf16.msra.mxu0 %v113
    %136 = vmatprep.subr.bf16.mxu0 0
    %137 = vmatpush1.bf16.msra.mxu0 %v114
    %138 = vmatprep.subr.bf16.mxu0 0
    %139 = vmatpush1.bf16.msra.mxu0 %v115
    %140 = vmatprep.subr.bf16.mxu0 0
    %141 = vmatpush1.bf16.msra.mxu0 0
    %142 = vmatprep.subr.bf16.mxu0 0
    %143 = vmatpush1.bf16.msra.mxu0 0
    %144 = vmatprep.subr.bf16.mxu0 0
    %145 = vmatpush1.bf16.msra.mxu0 0
    %146 = vmatprep.subr.bf16.mxu0 0
    %147 = vmatpush1.bf16.msra.mxu0 0
    %148 = vmatprep.subr.bf16.mxu0 0
    %149 = vmatpush1.bf16.msra.mxu0 0
    %150 = vmatprep.subr.bf16.mxu0 0
    %151 = vmatpush1.bf16.msra.mxu0 0
    %152 = vmatprep.subr.bf16.mxu0 0
    %153 = vmatpush1.bf16.msra.mxu0 0
    %154 = vmatprep.subr.bf16.mxu0 0
    %155 = vmatpush1.bf16.msra.mxu0 0
    %156 = vmatprep.mubr.bf16.mxu0 0
    %157 = vmatmul.mubr.bf16.gmra.mrb[0].mxu0 %v59
    %v158 = vpop.f32.mrb[0].mxu0
    %v159 = vadd.f32 0.0, %v158
    %v160 = vpop.f32.mrb[0].mxu0
    %v161 = vpop.f32.mrb[0].mxu0
    %v162 = vpop.f32.mrb[0].mxu0
    %163 = vdwg.mxu0
    %v164 = vmul.f32 %v159, 0.5
    %v165 = vmul.f32 %v159, 0.70710677
    %v166 = verf.f32.pop %v165
    %v167 = vadd.f32 %v166, 1.0
    %v168 = vmul.f32 %v164, %v167
    %v169 = vpack.c.bf16 %v168, %v168
    %v170 = vld [vmem:[#allocation7] sm:$0xf]
    %v171 = vld [vmem:[#allocation7 + $0x4] sm:$0xf]
    %v172 = vld [vmem:[#allocation7 + $0x8] sm:$0xf]
    %v173 = vld [vmem:[#allocation7 + $0xc] sm:$0xf]
    %v174 = vld [vmem:[#allocation7 + $0x10] sm:$0xf]
    %v175 = vld [vmem:[#allocation7 + $0x14] sm:$0xf]
    %v176 = vld [vmem:[#allocation7 + $0x18] sm:$0xf]
    %v177 = vld [vmem:[#allocation7 + $0x1c] sm:$0xf]
    %v178 = vld [vmem:[#allocation7 + $0x20] sm:$0xf]
    %v179 = vld [vmem:[#allocation7 + $0x24] sm:$0xf]
    %v180 = vld [vmem:[#allocation7 + $0x28] sm:$0xf]
    %v181 = vld [vmem:[#allocation7 + $0x2c] sm:$0xf]
    %v182 = vld [vmem:[#allocation7 + $0x30] sm:$0xf]
    %v183 = vld [vmem:[#allocation7 + $0x34] sm:$0xf]
    %v184 = vld [vmem:[#allocation7 + $0x38] sm:$0xf]
    %v185 = vld [vmem:[#allocation7 + $0x3c] sm:$0xf]
    %v186 = vld [vmem:[%s3] sm:$0x1]
    %v188 = vlaneseq
    %v189 = vshrl.u32 %v188, 7
    %v190 = vsub.s32 0, %v189
    %v191 = vrot.slane %v186, %v190
    %v209 = vunpack.c.l.b16 %v170
    %v210 = vunpack.c.l.b16 %v171
    %v211 = vunpack.c.l.b16 %v172
    %v212 = vunpack.c.l.b16 %v173
    %v213 = vunpack.c.l.b16 %v174
    %v214 = vunpack.c.l.b16 %v175
    %v215 = vunpack.c.l.b16 %v176
    %v216 = vunpack.c.l.b16 %v177
    %v217 = vunpack.c.l.b16 %v178
    %v218 = vunpack.c.l.b16 %v179
    %v219 = vunpack.c.l.b16 %v180
    %v220 = vunpack.c.l.b16 %v181
    %v221 = vunpack.c.l.b16 %v182
    %v222 = vunpack.c.l.b16 %v183
    %v223 = vunpack.c.l.b16 %v184
    %v224 = vunpack.c.l.b16 %v185
    %v225 = vpack.c.b16 %v210, %v209
    %v226 = vpack.c.b16 %v212, %v211
    %v227 = vpack.c.b16 %v214, %v213
    %v228 = vpack.c.b16 %v216, %v215
    %v229 = vpack.c.b16 %v218, %v217
    %v230 = vpack.c.b16 %v220, %v219
    %v231 = vpack.c.b16 %v222, %v221
    %v232 = vpack.c.b16 %v224, %v223
    %241 = vmatprep.subr.bf16.mxu0 0
    %242 = vmatpush1.bf16.msra.mxu0 %v225
    %243 = vmatprep.subr.bf16.mxu0 0
    %244 = vmatpush1.bf16.msra.mxu0 %v226
    %245 = vmatprep.subr.bf16.mxu0 0
    %246 = vmatpush1.bf16.msra.mxu0 %v227
    %247 = vmatprep.subr.bf16.mxu0 0
    %248 = vmatpush1.bf16.msra.mxu0 %v228
    %249 = vmatprep.subr.bf16.mxu0 0
    %250 = vmatpush1.bf16.msra.mxu0 %v229
    %251 = vmatprep.subr.bf16.mxu0 0
    %252 = vmatpush1.bf16.msra.mxu0 %v230
    %253 = vmatprep.subr.bf16.mxu0 0
    %254 = vmatpush1.bf16.msra.mxu0 %v231
    %255 = vmatprep.subr.bf16.mxu0 0
    %256 = vmatpush1.bf16.msra.mxu0 %v232
    %257 = vmatprep.subr.bf16.mxu0 0
    %258 = vmatpush1.bf16.msra.mxu0 0
    %259 = vmatprep.subr.bf16.mxu0 0
    %260 = vmatpush1.bf16.msra.mxu0 0
    %261 = vmatprep.subr.bf16.mxu0 0
    %262 = vmatpush1.bf16.msra.mxu0 0
    %263 = vmatprep.subr.bf16.mxu0 0
    %264 = vmatpush1.bf16.msra.mxu0 0
    %265 = vmatprep.subr.bf16.mxu0 0
    %266 = vmatpush1.bf16.msra.mxu0 0
    %267 = vmatprep.subr.bf16.mxu0 0
    %268 = vmatpush1.bf16.msra.mxu0 0
    %269 = vmatprep.subr.bf16.mxu0 0
    %270 = vmatpush1.bf16.msra.mxu0 0
    %271 = vmatprep.subr.bf16.mxu0 0
    %272 = vmatpush1.bf16.msra.mxu0 0
    %273 = vmatprep.mubr.bf16.mxu0 0
    %274 = vmatmul.mubr.bf16.gmra.mrb[0].mxu0 %v169
    %v275 = vpop.f32.mrb[0].mxu0
    %v276 = vadd.f32 %v191, %v275
    %v277 = vpop.f32.mrb[0].mxu0
    %v278 = vpop.f32.mrb[0].mxu0
    %v279 = vpop.f32.mrb[0].mxu0
    %280 = vdwg.mxu0
    %281 = vst [vmem:[#allocation8] sm:$0xff] %v276
    // Predicated region
    $region30: #{tpu_custom_call.1} parent=1 // pred_check
      _
    $region31: #{tpu_custom_call.1} parent=1 // pred_check_branch
      %283 = sbr.rel (0) target = $region33
    $region32: #{tpu_custom_call.1} parent=1 // pred_region
      %s285 = ssub.s32 128, 128
      %286 = vsyncadd [#allocation4], %s285
      %s288 = sshll.u32 [#allocation8], 4
      %s289 = int_to_ptr.vmem [resolvable:$true] %s288
      %291 = dma.vmem_to_hbm [thread:$0]  %s289, 128, %s4, [#allocation4]
    $region33: #{tpu_custom_call.1} parent=1 // pred_fallthru
      _
    // Predicated region
    $region34: #{tpu_custom_call.1} parent=1 // pred_check
      _
    $region35: #{tpu_custom_call.1} parent=1 // pred_check_branch
      %293 = sbr.rel (0) target = $region37
    $region36: #{tpu_custom_call.1} parent=1 // pred_region
      %294 = dma.done [#allocation4], 128
    $region37: #{tpu_custom_call.1} parent=1 // pred_fallthru
      _
    %295 = vsyncpa [#allocation3], 1
    %296 = vsyncpa [#allocation6], 1
    %297 = vsyncpa [#allocation4], 1

</llo_original>
